<compile_context>
chip_gen: v6e
topology: v6e:2x2x1
jax: 0.10.0
libtpu: 0.0.40
codegen_flags: <defaults>
</compile_context>

<pallas_src>
import functools

import jax
import jax.numpy as jnp
from jax.experimental import pallas as pl
from jax.experimental.pallas import tpu as pltpu


def conv_feat_kernel(h_ref, w_ref, b_ref, o_ref, *, l_out, cl, halo, ksize, n_chunks):
    # h_ref: (TB, Lpad, D)   TB batch rows, length padded so every extended chunk read
    #                        of (cl + halo) rows stays in bounds (pad rows are zero).
    # w_ref: (K*D, Cp)       fused-tap, channel-padded conv weight.
    # b_ref: (1, Cp)         channel-padded bias (f32), applied AFTER the max-pool.
    # o_ref: (1, TB, Cp)     pooled features for this batch block.
    tb = h_ref.shape[0]
    cp = o_ref.shape[2]

    w = w_ref[...]  # small, hoisted out of the loop

    def chunk_body(c, running_max):
        start = pl.multiple_of(c * cl, 8)
        # Extended chunk (includes the halo rows needed by the K tap shifts).
        hc = h_ref[:, pl.ds(start, cl + halo), :]          # (TB, cl+halo, D)
        # Fuse the K taps into the lane dim of the LHS: shifted copies of the SMALL
        # input chunk (not the f32 result) concatenated along lanes.
        if ksize == 1:
            lhs = hc[:, :cl, :]
        else:
            lhs = jnp.concatenate([hc[:, k:k + cl, :] for k in range(ksize)], axis=-1)
        lhs = lhs.reshape(tb * cl, lhs.shape[-1])          # (TB*cl, K*D) -- cl % 8 == 0
        y = jnp.dot(lhs, w, preferred_element_type=jnp.float32)   # one MXU pass per chunk
        y = y.reshape(tb, cl, cp)
        # Cheap validity mask: sublane iota over the chunk only; -inf because bias/ReLU
        # are deferred past the pool (0-masking would be wrong for all-negative windows).
        t_idx = jax.lax.broadcasted_iota(jnp.int32, (cl, cp), 0) + start
        y = jnp.where((t_idx < l_out)[None], y, -jnp.inf)
        return jnp.maximum(running_max, jnp.max(y, axis=1))       # (TB, Cp)

    init = jnp.full((tb, cp), -jnp.inf, dtype=jnp.float32)
    m = jax.lax.fori_loop(0, n_chunks, chunk_body, init, unroll=(n_chunks <= 8))

    # Deferred bias + ReLU on the tiny (TB, Cp) pooled result.
    o_ref[0] = jnp.maximum(m + b_ref[...], 0.0)


def conv_feat_extractor(h, weight, bias, *, mxu_dtype=None, chunk_rows=512,
                        vmem_budget_bytes=12 << 20):
    """h: (B, L, D); weight: (K, D, C); bias: (C,) -> (B, C, 1) float32.

    mxu_dtype=jnp.bfloat16 feeds the MXU in bf16 (f32 accumulation) for ~2x HBM /
    ~4x MXU on v6e/v7x; default None keeps the input dtype for exact parity.
    """
    B, L, D = h.shape
    K, Dw, C = weight.shape
    assert Dw == D, (Dw, D)
    L_out = L - K + 1
    assert L_out >= 1, "sequence length must be >= kernel_size"

    cdtype = mxu_dtype or h.dtype
    h = h.astype(cdtype)
    weight = weight.astype(cdtype)

    # Lane-dense channels: pad C to a multiple of 128 (zero columns are free on the MXU
    # and every store is a full unmasked vreg).
    Cp = 128 * pl.cdiv(C, 128)
    w_p = jnp.pad(weight.reshape(K * D, C), ((0, 0), (0, Cp - C)))     # fused-tap weight
    b_p = jnp.pad(bias.astype(jnp.float32), (0, Cp - C)).reshape(1, Cp)

    # Length chunking (streamed inside the kernel): chunk of conv-output rows, plus a
    # sublane-aligned halo so tap shifts never read past the block.
    halo = 8 * pl.cdiv(K - 1, 8) if K > 1 else 0
    cl = max(8, min(chunk_rows, 8 * pl.cdiv(L_out, 8)))
    nl = pl.cdiv(L_out, cl)
    Lpad = 8 * pl.cdiv(max(L, nl * cl + halo), 8)
    if Lpad != L:
        h = jnp.pad(h, ((0, 0), (0, Lpad - L), (0, 0)))

    # Size TB from TOTAL live VMEM per grid step (not just input bytes):
    #   double-buffered input block + extended chunk + fused-tap LHS + f32 chunk result.
    itemsize = jnp.dtype(cdtype).itemsize
    lane_d = 128 * pl.cdiv(D, 128)           # VMEM lane-pads minor dims < 128
    kd_lanes = 128 * pl.cdiv(K * D, 128)
    per_row = (2 * Lpad * lane_d * itemsize          # input block, double-buffered
               + (cl + halo) * lane_d * itemsize     # loaded extended chunk
               + cl * kd_lanes * itemsize            # fused-tap LHS
               + cl * Cp * 4                         # f32 matmul result
               + 4 * Cp * 4)                         # running max / small temps
    tb = max(1, vmem_budget_bytes // per_row)
    tb = min(tb, B)
    if B >= 2:
        tb = min(tb, max(1, pl.cdiv(B, 4)))  # >= 4 grid steps when possible (v7x 2 TCs)
    nb = pl.cdiv(B, tb)
    Bp = nb * tb
    if Bp != B:
        h = jnp.pad(h, ((0, Bp - B), (0, 0), (0, 0)))

    out = pl.pallas_call(
        functools.partial(conv_feat_kernel, l_out=L_out, cl=cl, halo=halo,
                          ksize=K, n_chunks=nl),
        out_shape=jax.ShapeDtypeStruct((nb, tb, Cp), jnp.float32),
        grid_spec=pltpu.PrefetchScalarGridSpec(
            num_scalar_prefetch=0,
            grid=(nb,),
            in_specs=[
                pl.BlockSpec((tb, Lpad, D), lambda i: (i, 0, 0)),   # TB batch rows
                pl.BlockSpec((K * D, Cp), lambda i: (0, 0)),        # fused-tap weight
                pl.BlockSpec((1, Cp), lambda i: (0, 0)),            # bias
            ],
            out_specs=pl.BlockSpec((1, tb, Cp), lambda i: (i, 0, 0)),
        ),
        compiler_params=pltpu.CompilerParams(
            dimension_semantics=("parallel",),
            vmem_limit_bytes=32 * 1024 * 1024,
        ),
    )(h, w_p, b_p)

    # Strip channel / batch padding and match PyTorch max_pool1d output shape.
    return out.reshape(Bp, Cp)[:B, :C].reshape(B, C, 1)


def reference(h, weight, bias):
    """Pure-JAX reference mirroring the PyTorch forward."""
    B, L, D = h.shape
    K, _, C = weight.shape
    L_out = L - K + 1
    windows = jnp.stack([h[:, k:k + L_out, :] for k in range(K)], axis=2)  # (B,L_out,K,D)
    logit = jnp.einsum("btkd,kdc->btc", windows, weight) + bias            # (B,L_out,C)
    logit = jnp.maximum(logit, 0.0)
    return jnp.max(logit, axis=1)[:, :, None]                              # (B,C,1)


if __name__ == "__main__":
    # Small shapes consistent with the module's forward: h is (batch, len, dim_hidden).
    B, L, D = 16, 16, 32         # batch, seq len, dim_hidden
    C, K = 8, 3                  # channel, kernel_size

    key = jax.random.PRNGKey(0)
    k_h, k_w = jax.random.split(key)

    h = jax.random.normal(k_h, (B, L, D), dtype=jnp.float32)
    # nn.init.uniform_(conv.weight, -0.01, 0.01); nn.init.constant_(conv.bias, 0.0)
    weight = jax.random.uniform(k_w, (K, D, C), dtype=jnp.float32,
                                minval=-0.01, maxval=0.01)
    bias = jnp.zeros((C,), dtype=jnp.float32)

    out = jax.block_until_ready(conv_feat_extractor(h, weight, bias))
    ref = reference(h, weight, bias)

    assert out.shape == (B, C, 1), out.shape
    err = jnp.max(jnp.abs(out - ref))
    assert jnp.allclose(out, ref, atol=1e-5, rtol=1e-5), f"max abs err {err}"

    print("KERNEL_OK")
</pallas_src>

<mosaic_0001>
module attributes {stable_mosaic.version = 11 : i64} {
  func.func @conv_feat_kernel(%arg0: i32, %arg1: memref<4x24x32xf32, #tpu.memory_space<vmem>>, %arg2: memref<96x128xf32, #tpu.memory_space<vmem>>, %arg3: memref<1x128xf32, #tpu.memory_space<vmem>>, %arg4: memref<1x4x128xf32, #tpu.memory_space<vmem>>) attributes {dimension_semantics = [#tpu.dimension_semantics<parallel>], iteration_bounds = array<i64: 4>, scalar_prefetch = 0 : i64, scratch_operands = 0 : i64, tpu.core_type = #tpu.core_type<tc>, window_params = [{transform_indices = @transform_0, window_bounds = array<i64: 4, 24, 32>}, {pipeline_mode = #tpu.pipeline_mode<synchronous>, transform_indices = @transform_1, window_bounds = array<i64: 96, 128>}, {pipeline_mode = #tpu.pipeline_mode<synchronous>, transform_indices = @transform_2, window_bounds = array<i64: 1, 128>}, {transform_indices = @transform_3, window_bounds = array<i64: 1, 4, 128>}]} {
    %c0 = arith.constant 0 : index
    %c0_0 = arith.constant 0 : index
    %0 = vector.load %arg2[%c0, %c0_0] : memref<96x128xf32, #tpu.memory_space<vmem>>, vector<96x128xf32>
    %cst = arith.constant 0xFF800000 : f32
    %1 = vector.broadcast %cst : f32 to vector<4x128xf32>
    %c0_i32 = arith.constant 0 : i32
    %c16_i32 = arith.constant 16 : i32
    %2 = arith.muli %c0_i32, %c16_i32 : i32
    %3 = tpu.assume_multiple %2, 8 : i32
    %c0_1 = arith.constant 0 : index
    %4 = arith.index_cast %3 : i32 to index
    %c0_2 = arith.constant 0 : index
    %5 = vector.load %arg1[%c0_1, %4, %c0_2] : memref<4x24x32xf32, #tpu.memory_space<vmem>>, vector<4x24x32xf32>
    %6 = vector.extract_strided_slice %5 {offsets = [0, 0, 0], sizes = [4, 16, 32], strides = [1, 1, 1]} : vector<4x24x32xf32> to vector<4x16x32xf32>
    %7 = vector.extract_strided_slice %5 {offsets = [0, 1, 0], sizes = [4, 16, 32], strides = [1, 1, 1]} : vector<4x24x32xf32> to vector<4x16x32xf32>
    %8 = vector.extract_strided_slice %5 {offsets = [0, 2, 0], sizes = [4, 16, 32], strides = [1, 1, 1]} : vector<4x24x32xf32> to vector<4x16x32xf32>
    %9 = tpu.concatenate %6, %7, %8 in 2 : vector<4x16x32xf32>, vector<4x16x32xf32>, vector<4x16x32xf32> -> vector<4x16x96xf32>
    %10 = vector.shape_cast %9 : vector<4x16x96xf32> to vector<64x96xf32>
    %cst_3 = arith.constant dense<0.000000e+00> : vector<64x128xf32>
    %11 = tpu.matmul %10, %0, %cst_3 {dimension_numbers = #tpu.dot_dimension_numbers<[1], [0], [0], [1], [0, 0, 1, 1], [], []>} : vector<64x96xf32>, vector<96x128xf32>, vector<64x128xf32> -> vector<64x128xf32>
    %12 = vector.shape_cast %11 : vector<64x128xf32> to vector<4x16x128xf32>
    %13 = tpu.iota {dimensions = array<i32: 0>} : vector<16x128xi32>
    %14 = vector.broadcast %3 : i32 to vector<16x128xi32>
    %15 = arith.addi %13, %14 : vector<16x128xi32>
    %c14_i32 = arith.constant 14 : i32
    %16 = vector.broadcast %c14_i32 : i32 to vector<16x128xi32>
    %17 = arith.cmpi slt, %15, %16 : vector<16x128xi32>
    %18 = vector.shape_cast %17 : vector<16x128xi1> to vector<1x16x128xi1>
    %cst_4 = arith.constant 0xFF800000 : f32
    %19 = vector.shape_cast %18 : vector<1x16x128xi1> to vector<1x16x128xi1>
    %20 = vector.broadcast %19 : vector<1x16x128xi1> to vector<4x16x128xi1>
    %21 = vector.broadcast %cst_4 : f32 to vector<4x16x128xf32>
    %22 = arith.select %20, %12, %21 : vector<4x16x128xi1>, vector<4x16x128xf32>
    %cst_5 = arith.constant dense<0xFF800000> : vector<4x128xf32>
    %23 = vector.multi_reduction <maximumf>, %22, %cst_5 [1] : vector<4x16x128xf32> to vector<4x128xf32>
    %24 = arith.maximumf %1, %23 : vector<4x128xf32>
    %c1_i32 = arith.constant 1 : i32
    %c0_6 = arith.constant 0 : index
    %c0_7 = arith.constant 0 : index
    %25 = vector.load %arg3[%c0_6, %c0_7] : memref<1x128xf32, #tpu.memory_space<vmem>>, vector<1x128xf32>
    %26 = vector.broadcast %25 : vector<1x128xf32> to vector<4x128xf32>
    %27 = arith.addf %24, %26 : vector<4x128xf32>
    %cst_8 = arith.constant 0.000000e+00 : f32
    %28 = vector.broadcast %cst_8 : f32 to vector<4x128xf32>
    %29 = arith.maximumf %27, %28 : vector<4x128xf32>
    %c0_9 = arith.constant 0 : index
    %c0_10 = arith.constant 0 : index
    %c0_11 = arith.constant 0 : index
    %30 = vector.load %arg4[%c0_9, %c0_10, %c0_11] : memref<1x4x128xf32, #tpu.memory_space<vmem>>, vector<1x4x128xf32>
    %31 = vector.shape_cast %30 : vector<1x4x128xf32> to vector<4x128xf32>
    %32 = vector.shape_cast %29 : vector<4x128xf32> to vector<1x4x128xf32>
    tpu.vector_store %arg4[%c0_9, %c0_10, %c0_11], %32 {strides = array<i32>} : memref<1x4x128xf32, #tpu.memory_space<vmem>>, vector<1x4x128xf32>,
    return
  }
  func.func @transform_0(%arg0: i32) -> (i32, i32, i32) {
    %c0_i32 = arith.constant 0 : i32
    %c0_i32_0 = arith.constant 0 : i32
    %c0_i32_1 = arith.constant 0 : i32
    return %arg0, %c0_i32, %c0_i32_0 : i32, i32, i32
  }
  func.func @transform_1(%arg0: i32) -> (i32, i32) {
    %c0_i32 = arith.constant 0 : i32
    %c0_i32_0 = arith.constant 0 : i32
    %c0_i32_1 = arith.constant 0 : i32
    return %c0_i32, %c0_i32_0 : i32, i32
  }
  func.func @transform_2(%arg0: i32) -> (i32, i32) {
    %c0_i32 = arith.constant 0 : i32
    %c0_i32_0 = arith.constant 0 : i32
    %c0_i32_1 = arith.constant 0 : i32
    return %c0_i32, %c0_i32_0 : i32, i32
  }
  func.func @transform_3(%arg0: i32) -> (i32, i32, i32) {
    %c0_i32 = arith.constant 0 : i32
    %c0_i32_0 = arith.constant 0 : i32
    %c0_i32_1 = arith.constant 0 : i32
    return %arg0, %c0_i32, %c0_i32_0 : i32, i32, i32
  }
}

</mosaic_0001>

<llo_original>
// kernel: tpu_custom_call.1
$region0: #{tpu_custom_call.1}
  #allocation0 [shape = 'u32[]', space=smem, size = 0x4, offset = 0x4, fixed_abs, tag = 'smem constant byte address 0x4 - core index']
  #allocation1 [shape = 'u32[144,128]{1,0:T(1,128)}', space=vmem, size = 0x12000, scoped, tag = 'internal scratch']
  %s0 = inlined_call_operand.hbm [shape: f32[16,24,32], index: 0, kind: input, shape index: {}]
  %s1 = inlined_call_operand.hbm [shape: f32[96,128], index: 1, kind: input, shape index: {}]
  %s2 = inlined_call_operand.vmem [shape: f32[1,128], index: 2, kind: input, shape index: {}]
  %s3 = inlined_call_operand.hbm [shape: f32[4,4,128], index: 3, kind: output, shape index: {}]
  %s4 = sld [smem:[#allocation0]]
  $region53: #{tpu_custom_call.1} parent=0
    _
  %s6 = ssub.s32 1, %s4
  %s7 = scalar_select 0, %s6, %s4
  $region1: #{tpu_custom_call.1} parent=0
    #allocation2 [shape = 'u8[98304]{0}', space=vmem, size = 0x18000, scoped, tag = 'input window, operand 0']
    #allocation3 [shape = 's32[2]{0}', space=sflag, size = 0x8, scoped, tag = 'scoped memory for tpu_custom_call.1']
    #allocation4 [shape = 's32[2]{0}', space=sflag, size = 0x8, scoped, tag = 'scoped memory for tpu_custom_call.1']
    #allocation5 [shape = 'u8[49152]{0}', space=vmem, size = 0xc000, scoped, tag = 'input window, operand 1, single buffered']
    #allocation6 [shape = 's32[1]{0}', space=sflag, size = 0x4, scoped, tag = 'scoped memory for tpu_custom_call.1']
    #allocation7 [shape = 'u8[4096]{0}', space=vmem, size = 0x1000, scoped, tag = 'output window, operand 0']
    %8 = vsyncpa [#allocation3], 0
    %s9 = scalar_lea.sflag [#allocation3], 1
    %10 = vsyncpa %s9, 0
    %11 = vsyncpa [#allocation6], 0
    %12 = vsyncpa [#allocation4], 0
    %s13 = scalar_lea.sflag [#allocation4], 1
    %14 = vsyncpa %s13, 0
    loop: start=0, step=1, limit=6
    $region2: #{tpu_custom_call.1} parent=1 // loop_pre_header
      _
    $region3: #{tpu_custom_call.1} parent=1 // loop_header
      %s16 = sphi 0, %s20
      %p17 = scmp.ge.s32.totalorder %s16, 6
      %s26 = sphi 0, %s28
      %s29 = sphi 0, %s26
      %s30 = sphi 0, %s29
      %s46 = sphi 0, %s30
      %s50 = sphi 0, %s50
      %s52 = sphi 0, %s50
      %s53 = sphi 0, %s52
      %s67 = sphi 0, %s53
      %s71 = sphi 0, %s71
      %s73 = sphi 0, %s71
      %s74 = sphi 0, %s73
      %s88 = sphi 0, %s74
      %s94 = sphi 0, %s96
      %s97 = sphi 0, %s94
      %s98 = sphi 0, %s97
      %s114 = sphi 0, %s98
    $region4: #{tpu_custom_call.1} parent=1 // loop_header_branch
      %19 = sbr.rel (%p17) target = $region8
    $region5: #{tpu_custom_call.1} parent=1 // loop_body
      %s21 = ssub.s32 %s16, 1
      %s22 = ssub.s32 %s16, 2
      %s23 = sadd.s32 %s16, 1
      %s24 = ssub.s32 %s16, %s23
      %p25 = scmp.eq.s32.totalorder %s24, 0
      %s27 = sadd.s32 %s26, 1
      %s28 = scalar_select %p25, %s26, %s27
      %p31 = pneg %p25
      %p32 = scmp.eq.s32.totalorder %s16, 3
      %p33 = por %p31, %p32
      %p34 = scmp.ne.s32.totalorder %s26, %s29
      %p35 = scmp.eq.s32.totalorder %s16, 0
      %p36 = por %p34, %p35
      %p37 = scmp.ne.s32.totalorder %s26, %s29
      %p38 = scmp.eq.s32.totalorder %s21, 3
      %p39 = por %p37, %p38
      %p40 = scmp.ne.s32.totalorder %s29, %s30
      %p41 = scmp.eq.s32.totalorder %s21, 0
      %p42 = por %p40, %p41
      %p43 = scmp.ne.s32.totalorder %s29, %s30
      %p44 = scmp.eq.s32.totalorder %s22, 3
      %p45 = por %p43, %p44
      %p47 = scmp.ne.s32.totalorder %s30, %s46
      %p48 = scmp.eq.s32.totalorder %s22, 0
      %p49 = por %p47, %p48
      %s51 = sadd.s32 %s50, 1
      %p54 = scmp.eq.s32.totalorder %s16, 3
      %p55 = scmp.ne.s32.totalorder %s50, %s52
      %p56 = scmp.eq.s32.totalorder %s16, 0
      %p57 = por %p55, %p56
      %p58 = scmp.ne.s32.totalorder %s50, %s52
      %p59 = scmp.eq.s32.totalorder %s21, 3
      %p60 = por %p58, %p59
      %p61 = scmp.ne.s32.totalorder %s52, %s53
      %p62 = scmp.eq.s32.totalorder %s21, 0
      %p63 = por %p61, %p62
      %p64 = scmp.ne.s32.totalorder %s52, %s53
      %p65 = scmp.eq.s32.totalorder %s22, 3
      %p66 = por %p64, %p65
      %p68 = scmp.ne.s32.totalorder %s53, %s67
      %p69 = scmp.eq.s32.totalorder %s22, 0
      %p70 = por %p68, %p69
      %s72 = sadd.s32 %s71, 1
      %p75 = scmp.eq.s32.totalorder %s16, 3
      %p76 = scmp.ne.s32.totalorder %s71, %s73
      %p77 = scmp.eq.s32.totalorder %s16, 0
      %p78 = por %p76, %p77
      %p79 = scmp.ne.s32.totalorder %s71, %s73
      %p80 = scmp.eq.s32.totalorder %s21, 3
      %p81 = por %p79, %p80
      %p82 = scmp.ne.s32.totalorder %s73, %s74
      %p83 = scmp.eq.s32.totalorder %s21, 0
      %p84 = por %p82, %p83
      %p85 = scmp.ne.s32.totalorder %s73, %s74
      %p86 = scmp.eq.s32.totalorder %s22, 3
      %p87 = por %p85, %p86
      %p89 = scmp.ne.s32.totalorder %s74, %s88
      %p90 = scmp.eq.s32.totalorder %s22, 0
      %p91 = por %p89, %p90
      %s92 = ssub.s32 %s16, %s23
      %p93 = scmp.eq.s32.totalorder %s92, 0
      %s95 = sadd.s32 %s94, 1
      %s96 = scalar_select %p93, %s94, %s95
      %p99 = pneg %p93
      %p100 = scmp.eq.s32.totalorder %s16, 3
      %p101 = por %p99, %p100
      %p102 = scmp.ne.s32.totalorder %s94, %s97
      %p103 = scmp.eq.s32.totalorder %s16, 0
      %p104 = por %p102, %p103
      %p105 = scmp.ne.s32.totalorder %s94, %s97
      %p106 = scmp.eq.s32.totalorder %s21, 3
      %p107 = por %p105, %p106
      %p108 = scmp.ne.s32.totalorder %s97, %s98
      %p109 = scmp.eq.s32.totalorder %s21, 0
      %p110 = por %p108, %p109
      %p111 = scmp.ne.s32.totalorder %s97, %s98
      %p112 = scmp.eq.s32.totalorder %s22, 3
      %p113 = por %p111, %p112
      %p115 = scmp.ne.s32.totalorder %s98, %s114
      %p116 = scmp.eq.s32.totalorder %s22, 0
      %p117 = por %p115, %p116
      %p118 = scmp.le.s32.totalorder 1, %s16
      %p119 = scmp.lt.s32.totalorder %s16, 5
      %p120 = pnand %p118, %p119
      %p121 = pneg %p120
      // Predicated region
      $region9: #{tpu_custom_call.1} parent=5 // pred_check
        _
      $region10: #{tpu_custom_call.1} parent=5 // pred_check_branch
        %123 = sbr.rel (%p120) target = $region12
      $region11: #{tpu_custom_call.1} parent=5 // pred_region
        %s124 = ssub.s32 %s16, 1
        // Predicated region
        $region13: #{tpu_custom_call.1} parent=11 // pred_check
          %p125 = pneg %p63
        $region14: #{tpu_custom_call.1} parent=11 // pred_check_branch
          %127 = sbr.rel (%p125) target = $region16
        $region15: #{tpu_custom_call.1} parent=11 // pred_region
          %s129 = ssub.s32 1536, 1536
          %130 = vsyncadd [#allocation6], %s129
          %s131 = sshll.u32 [#allocation5], 4
          %s132 = int_to_ptr.vmem [resolvable:$true] %s131
          %137 = dma.hbm_to_vmem [thread:$0]  %s1, 1536, %s132, [#allocation6], 128, 128, 8
        $region16: #{tpu_custom_call.1} parent=11 // pred_fallthru
          _
        // Predicated region
        $region17: #{tpu_custom_call.1} parent=11 // pred_check
          %p138 = pneg %p84
        $region18: #{tpu_custom_call.1} parent=11 // pred_check_branch
          %140 = sbr.rel (%p138) target = $region20
        $region19: #{tpu_custom_call.1} parent=11 // pred_region
          _
        $region20: #{tpu_custom_call.1} parent=11 // pred_fallthru
          _
      $region12: #{tpu_custom_call.1} parent=5 // pred_fallthru
        _
      %p141 = scmp.lt.s32.totalorder %s16, 4
      // Predicated region
      $region21: #{tpu_custom_call.1} parent=5 // pred_check
        %p142 = pneg %p141
      $region22: #{tpu_custom_call.1} parent=5 // pred_check_branch
        %144 = sbr.rel (%p142) target = $region24
      $region23: #{tpu_custom_call.1} parent=5 // pred_region
        // Predicated region
        $region25: #{tpu_custom_call.1} parent=23 // pred_check
          %p145 = pneg %p36
        $region26: #{tpu_custom_call.1} parent=23 // pred_check_branch
          %147 = sbr.rel (%p145) target = $region28
        $region27: #{tpu_custom_call.1} parent=23 // pred_region
          %s148 = sand.u32 %s26, 1
          %s149 = scalar_lea.sflag [#allocation3], %s148
          %s150 = sand.u32 %s26, 1
          %s151 = smul.addr %s150, 96
          %s152 = scalar_lea.vmem [#allocation2], %s151
          %s153 = smul.u32 4, %s16
          %s155 = ssub.s32 1536, 1536
          %156 = vsyncadd %s149, %s155
          %s157 = smul.addr %s153, 3
          %s158 = smul.addr %s157, 128
          %s159 = scalar_lea.hbm %s0, %s158
          %s160 = sshll.u32 %s152, 4
          %s161 = int_to_ptr.vmem [resolvable:$true] %s160
          %166 = dma.hbm_to_vmem [thread:$0]  %s159, 1536, %s161, %s149, 128, 128, 8
        $region28: #{tpu_custom_call.1} parent=23 // pred_fallthru
          _
      $region24: #{tpu_custom_call.1} parent=5 // pred_fallthru
        _
      %p167 = scmp.le.s32.totalorder 1, %s16
      %p168 = scmp.lt.s32.totalorder %s16, 5
      %p169 = pnand %p167, %p168
      %p170 = pneg %p169
      // Predicated region
      $region29: #{tpu_custom_call.1} parent=5 // pred_check
        _
      $region30: #{tpu_custom_call.1} parent=5 // pred_check_branch
        %172 = sbr.rel (%p169) target = $region32
      $region31: #{tpu_custom_call.1} parent=5 // pred_region
        %s173 = ssub.s32 %s16, 1
        %s174 = sand.u32 %s29, 1
        %s175 = scalar_lea.sflag [#allocation3], %s174
        %s176 = sand.u32 %s29, 1
        %s177 = smul.addr %s176, 96
        %s178 = scalar_lea.vmem [#allocation2], %s177
        // Predicated region
        $region33: #{tpu_custom_call.1} parent=31 // pred_check
          %p179 = pneg %p42
        $region34: #{tpu_custom_call.1} parent=31 // pred_check_branch
          %181 = sbr.rel (%p179) target = $region36
        $region35: #{tpu_custom_call.1} parent=31 // pred_region
          %182 = dma.done %s175, 1536
        $region36: #{tpu_custom_call.1} parent=31 // pred_fallthru
          _
        // Predicated region
        $region37: #{tpu_custom_call.1} parent=31 // pred_check
          %p183 = pneg %p63
        $region38: #{tpu_custom_call.1} parent=31 // pred_check_branch
          %185 = sbr.rel (%p183) target = $region40
        $region39: #{tpu_custom_call.1} parent=31 // pred_region
          %186 = dma.done [#allocation6], 1536
        $region40: #{tpu_custom_call.1} parent=31 // pred_fallthru
          _
        %s187 = sand.u32 %s29, 1
        %s188 = scalar_lea.sflag [#allocation3], %s187
        %s189 = sand.u32 %s29, 1
        %s190 = smul.addr %s189, 96
        %s191 = scalar_lea.vmem [#allocation2], %s190
        %p192 = pneg %p42
        %p193 = pneg %p39
        %p194 = pneg %p63
        %p195 = pneg %p60
        %p196 = pneg %p84
        %p197 = pneg %p81
        %p198 = pneg %p110
        %p199 = pneg %p107
        %s200 = sand.u32 %s97, 1
        %s201 = scalar_lea.sflag [#allocation4], %s200
        %s202 = sand.u32 %s97, 1
        %s203 = smul.addr %s202, 4
        %s204 = scalar_lea.vmem [#allocation7], %s203
        %s205 = smul.u32 4, %s21
        %v206 = vld [vmem:[#allocation5] sm:$0xff]
        %v207 = vld [vmem:[#allocation5 + $0x8] sm:$0xff]
        %v208 = vld [vmem:[#allocation5 + $0x10] sm:$0xff]
        %v209 = vld [vmem:[#allocation5 + $0x18] sm:$0xff]
        %v210 = vld [vmem:[#allocation5 + $0x20] sm:$0xff]
        %v211 = vld [vmem:[#allocation5 + $0x28] sm:$0xff]
        %v212 = vld [vmem:[#allocation5 + $0x30] sm:$0xff]
        %v213 = vld [vmem:[#allocation5 + $0x38] sm:$0xff]
        %v214 = vld [vmem:[#allocation5 + $0x40] sm:$0xff]
        %v215 = vld [vmem:[#allocation5 + $0x48] sm:$0xff]
        %v216 = vld [vmem:[#allocation5 + $0x50] sm:$0xff]
        %v217 = vld [vmem:[#allocation5 + $0x58] sm:$0xff]
        %v218 = vld [vmem:[%s178] sm:$0xff]
        %v219 = vld [vmem:[%s178 + $0x8] sm:$0xff]
        %v220 = vld [vmem:[%s178 + $0x10] sm:$0xff]
        %v221 = vld [vmem:[%s178 + $0x18] sm:$0xff]
        %v222 = vld [vmem:[%s178 + $0x20] sm:$0xff]
        %v223 = vld [vmem:[%s178 + $0x28] sm:$0xff]
        %v224 = vld [vmem:[%s178 + $0x30] sm:$0xff]
        %v225 = vld [vmem:[%s178 + $0x38] sm:$0xff]
        %v226 = vld [vmem:[%s178 + $0x40] sm:$0xff]
        %v227 = vld [vmem:[%s178 + $0x48] sm:$0xff]
        %v228 = vld [vmem:[%s178 + $0x50] sm:$0xff]
        %v229 = vld [vmem:[%s178 + $0x58] sm:$0xff]
        %vm242 = vcmask 1046528
        %v243 = vrot.slane %v218, 1
        %v244 = vrot.slane %v219, 1
        %v245 = vsel %vm242, %v243, %v244
        %v246 = vrot.slane %v220, 1
        %v247 = vsel %vm242, %v244, %v246
        %v248 = vrot.slane %v221, 1
        %v249 = vrot.slane %v222, 1
        %v250 = vsel %vm242, %v248, %v249
        %v251 = vrot.slane %v223, 1
        %v252 = vsel %vm242, %v249, %v251
        %v253 = vrot.slane %v224, 1
        %v254 = vrot.slane %v225, 1
        %v255 = vsel %vm242, %v253, %v254
        %v256 = vrot.slane %v226, 1
        %v257 = vsel %vm242, %v254, %v256
        %v258 = vrot.slane %v227, 1
        %v259 = vrot.slane %v228, 1
        %v260 = vsel %vm242, %v258, %v259
        %v261 = vrot.slane %v229, 1
        %v262 = vsel %vm242, %v259, %v261
        %263 = vrot.lane.b32.xlu0 %v245, 32
        %v264 = vpop.permute.xlu0 %263
        %265 = vrot.lane.b32.xlu0 %v247, 32
        %v266 = vpop.permute.xlu0 %265
        %267 = vrot.lane.b32.xlu0 %v250, 32
        %v268 = vpop.permute.xlu0 %267
        %269 = vrot.lane.b32.xlu0 %v252, 32
        %v270 = vpop.permute.xlu0 %269
        %271 = vrot.lane.b32.xlu0 %v255, 32
        %v272 = vpop.permute.xlu0 %271
        %273 = vrot.lane.b32.xlu0 %v257, 32
        %v274 = vpop.permute.xlu0 %273
        %275 = vrot.lane.b32.xlu0 %v260, 32
        %v276 = vpop.permute.xlu0 %275
        %277 = vrot.lane.b32.xlu0 %v262, 32
        %v278 = vpop.permute.xlu0 %277
        %vm287 = vcmask 1045504
        %v288 = vrot.slane %v218, 2
        %v289 = vrot.slane %v219, 2
        %v290 = vsel %vm287, %v288, %v289
        %v291 = vrot.slane %v220, 2
        %v292 = vsel %vm287, %v289, %v291
        %v293 = vrot.slane %v221, 2
        %v294 = vrot.slane %v222, 2
        %v295 = vsel %vm287, %v293, %v294
        %v296 = vrot.slane %v223, 2
        %v297 = vsel %vm287, %v294, %v296
        %v298 = vrot.slane %v224, 2
        %v299 = vrot.slane %v225, 2
        %v300 = vsel %vm287, %v298, %v299
        %v301 = vrot.slane %v226, 2
        %v302 = vsel %vm287, %v299, %v301
        %v303 = vrot.slane %v227, 2
        %v304 = vrot.slane %v228, 2
        %v305 = vsel %vm287, %v303, %v304
        %v306 = vrot.slane %v229, 2
        %v307 = vsel %vm287, %v304, %v306
        %308 = vrot.lane.b32.xlu0 %v290, 64
        %v309 = vpop.permute.xlu0 %308
        %310 = vrot.lane.b32.xlu0 %v292, 64
        %v311 = vpop.permute.xlu0 %310
        %312 = vrot.lane.b32.xlu0 %v295, 64
        %v313 = vpop.permute.xlu0 %312
        %314 = vrot.lane.b32.xlu0 %v297, 64
        %v315 = vpop.permute.xlu0 %314
        %316 = vrot.lane.b32.xlu0 %v300, 64
        %v317 = vpop.permute.xlu0 %316
        %318 = vrot.lane.b32.xlu0 %v302, 64
        %v319 = vpop.permute.xlu0 %318
        %320 = vrot.lane.b32.xlu0 %v305, 64
        %v321 = vpop.permute.xlu0 %320
        %322 = vrot.lane.b32.xlu0 %v307, 64
        %v323 = vpop.permute.xlu0 %322
        %vm332 = vcmask 261120
        %v333 = vsel %vm332, %v218, %v264
        %v334 = vsel %vm332, %v219, %v266
        %v335 = vsel %vm332, %v221, %v268
        %v336 = vsel %vm332, %v222, %v270
        %v337 = vsel %vm332, %v224, %v272
        %v338 = vsel %vm332, %v225, %v274
        %v339 = vsel %vm332, %v227, %v276
        %v340 = vsel %vm332, %v228, %v278
        %vm341 = vcmask 523264
        %v342 = vsel %vm341, %v333, %v309
        %v343 = vsel %vm341, %v334, %v311
        %v344 = vsel %vm341, %v335, %v313
        %v345 = vsel %vm341, %v336, %v315
        %v346 = vsel %vm341, %v337, %v317
        %v347 = vsel %vm341, %v338, %v319
        %v348 = vsel %vm341, %v339, %v321
        %v349 = vsel %vm341, %v340, %v323
        %vm350 = vcmask 785408
        %v352 = vsel %vm350, %v342, 0
        %v355 = vsel %vm350, %v343, 0
        %v358 = vsel %vm350, %v344, 0
        %v361 = vsel %vm350, %v345, 0
        %v364 = vsel %vm350, %v346, 0
        %v367 = vsel %vm350, %v347, 0
        %v370 = vsel %vm350, %v348, 0
        %v373 = vsel %vm350, %v349, 0
        %375 = vmatprep.subr.mxu0 0.0
        %376 = vmatpush1.msra.mxu0 0.0
        %377 = vmatprep.subr.mxu0 0.0
        %378 = vmatpush1.msra.mxu0 0.0
        %379 = vmatprep.subr.mxu0 0.0
        %380 = vmatpush1.msra.mxu0 0.0
        %381 = vmatprep.subr.mxu0 0.0
        %382 = vmatpush1.msra.mxu0 0.0
        %383 = vmatprep.subr.mxu0 0.0
        %384 = vmatpush1.msra.mxu0 %v217
        %385 = vmatprep.subr.mxu0 0.0
        %386 = vmatpush1.msra.mxu0 %v216
        %387 = vmatprep.subr.mxu0 0.0
        %388 = vmatpush1.msra.mxu0 %v215
        %389 = vmatprep.subr.mxu0 0.0
        %390 = vmatpush1.msra.mxu0 %v214
        %391 = vmatprep.subr.mxu0 0.0
        %392 = vmatpush1.msra.mxu0 %v213
        %393 = vmatprep.subr.mxu0 0.0
        %394 = vmatpush1.msra.mxu0 %v212
        %395 = vmatprep.subr.mxu0 0.0
        %396 = vmatpush1.msra.mxu0 %v211
        %397 = vmatprep.subr.mxu0 0.0
        %398 = vmatpush1.msra.mxu0 %v210
        %399 = vmatprep.subr.mxu0 0.0
        %400 = vmatpush1.msra.mxu0 %v209
        %401 = vmatprep.subr.mxu0 0.0
        %402 = vmatpush1.msra.mxu0 %v208
        %403 = vmatprep.subr.mxu0 0.0
        %404 = vmatpush1.msra.mxu0 %v207
        %405 = vmatprep.subr.mxu0 0.0
        %406 = vmatpush1.msra.mxu0 %v206
        %407 = vmatprep.subr.mxu0 0.0
        %408 = vmatpush2.msra.mxu0 0.0
        %409 = vmatprep.subr.mxu0 0.0
        %410 = vmatpush2.msra.mxu0 0.0
        %411 = vmatprep.subr.mxu0 0.0
        %412 = vmatpush2.msra.mxu0 0.0
        %413 = vmatprep.subr.mxu0 0.0
        %414 = vmatpush2.msra.mxu0 0.0
        %415 = vmatprep.subr.mxu0 0.0
        %416 = vmatpush2.msra.mxu0 0.0
        %417 = vmatprep.subr.mxu0 0.0
        %418 = vmatpush2.msra.mxu0 0.0
        %419 = vmatprep.subr.mxu0 0.0
        %420 = vmatpush2.msra.mxu0 0.0
        %421 = vmatprep.subr.mxu0 0.0
        %422 = vmatpush2.msra.mxu0 0.0
        %423 = vmatprep.subr.mxu0 0.0
        %424 = vmatpush2.msra.mxu0 0.0
        %425 = vmatprep.subr.mxu0 0.0
        %426 = vmatpush2.msra.mxu0 0.0
        %427 = vmatprep.subr.mxu0 0.0
        %428 = vmatpush2.msra.mxu0 0.0
        %429 = vmatprep.subr.mxu0 0.0
        %430 = vmatpush2.msra.mxu0 0.0
        %431 = vmatprep.subr.mxu0 0.0
        %432 = vmatpush2.msra.mxu0 0.0
        %433 = vmatprep.subr.mxu0 0.0
        %434 = vmatpush2.msra.mxu0 0.0
        %435 = vmatprep.subr.mxu0 0.0
        %436 = vmatpush2.msra.mxu0 0.0
        %437 = vmatprep.subr.mxu0 0.0
        %438 = vmatpush2.msra.mxu0 0.0
        %439 = vmatprep.mubr.f32.mxu0 0.0
        %440 = vmatmul.mubr.f32.gmra.mxu0 %v352
        %v441 = vpop.f32.mrf.mxu0
        %v442 = vadd.f32 0.0, %v441
        %v443 = vpop.f32.mrf.mxu0
        %444 = vmatprep.mubr.f32.mxu0 0.0
        %445 = vmatmul.mubr.f32.gmra.mxu0 %v355
        %v446 = vpop.f32.mrf.mxu0
        %v447 = vadd.f32 0.0, %v446
        %v448 = vpop.f32.mrf.mxu0
        %449 = vmatprep.mubr.f32.mxu0 0.0
        %450 = vmatmul.mubr.f32.gmra.mxu0 %v358
        %v451 = vpop.f32.mrf.mxu0
        %v452 = vadd.f32 0.0, %v451
        %v453 = vpop.f32.mrf.mxu0
        %454 = vmatprep.mubr.f32.mxu0 0.0
        %455 = vmatmul.mubr.f32.gmra.mxu0 %v361
        %v456 = vpop.f32.mrf.mxu0
        %v457 = vadd.f32 0.0, %v456
        %v458 = vpop.f32.mrf.mxu0
        %459 = vmatprep.mubr.f32.mxu0 0.0
        %460 = vmatmul.mubr.f32.gmra.mxu0 %v364
        %v461 = vpop.f32.mrf.mxu0
        %v462 = vadd.f32 0.0, %v461
        %v463 = vpop.f32.mrf.mxu0
        %464 = vmatprep.mubr.f32.mxu0 0.0
        %465 = vmatmul.mubr.f32.gmra.mxu0 %v367
        %v466 = vpop.f32.mrf.mxu0
        %v467 = vadd.f32 0.0, %v466
        %v468 = vpop.f32.mrf.mxu0
        %469 = vmatprep.mubr.f32.mxu0 0.0
        %470 = vmatmul.mubr.f32.gmra.mxu0 %v370
        %v471 = vpop.f32.mrf.mxu0
        %v472 = vadd.f32 0.0, %v471
        %v473 = vpop.f32.mrf.mxu0
        %474 = vmatprep.mubr.f32.mxu0 0.0
        %475 = vmatmul.mubr.f32.gmra.mxu0 %v373
        %v476 = vpop.f32.mrf.mxu0
        %v477 = vadd.f32 0.0, %v476
        %v478 = vpop.f32.mrf.mxu0
        %479 = vdwg.mxu0
        %v480 = vlaneseq
        %v481 = vshrl.u32 %v480, 7
        %v482 = vadd.s32 %v481, 8
        %v483 = vstv 0
        %v484 = vadd.s32 %v481, %v483
        %v485 = vadd.s32 %v482, %v483
        %vm486 = vcmp.lt.s32.totalorder %v484, 14
        %vm487 = vcmp.lt.s32.totalorder %v485, 14
        %v488 = vsel %vm486, 1, 0
        %v489 = vsel %vm487, 1, 0
        %vm490 = vcmp.eq.s32.totalorder %v488, 1
        %vm491 = vcmp.eq.s32.totalorder %v489, 1
        %v492 = vsel %vm490, %v442, -inf
        %v493 = vsel %vm491, %v447, -inf
        %v494 = vsel %vm490, %v452, -inf
        %v495 = vsel %vm491, %v457, -inf
        %v496 = vsel %vm490, %v462, -inf
        %v497 = vsel %vm491, %v467, -inf
        %v498 = vsel %vm490, %v472, -inf
        %v499 = vsel %vm491, %v477, -inf
        %v500 = vmax.f32 %v492, %v493
        %v501 = vrot.slane %v500, 4
        %v502 = vmax.f32 %v500, %v501
        %v503 = vrot.slane %v502, 2
        %v504 = vmax.f32 %v502, %v503
        %v505 = vrot.slane %v504, 1
        %v506 = vmax.f32 %v504, %v505
        %v507 = vmax.f32 %v494, %v495
        %v508 = vrot.slane %v507, 4
        %v509 = vmax.f32 %v507, %v508
        %v510 = vrot.slane %v509, 2
        %v511 = vmax.f32 %v509, %v510
        %v512 = vrot.slane %v511, 1
        %v513 = vmax.f32 %v511, %v512
        %v514 = vmax.f32 %v496, %v497
        %v515 = vrot.slane %v514, 4
        %v516 = vmax.f32 %v514, %v515
        %v517 = vrot.slane %v516, 2
        %v518 = vmax.f32 %v516, %v517
        %v519 = vrot.slane %v518, 1
        %v520 = vmax.f32 %v518, %v519
        %v521 = vmax.f32 %v498, %v499
        %v522 = vrot.slane %v521, 4
        %v523 = vmax.f32 %v521, %v522
        %v524 = vrot.slane %v523, 2
        %v525 = vmax.f32 %v523, %v524
        %v526 = vrot.slane %v525, 1
        %v527 = vmax.f32 %v525, %v526
        %v528 = vld [vmem:[%s2] sm:$0x1]
        %v530 = vlaneseq
        %v531 = vshrl.u32 %v530, 7
        %v532 = vsub.s32 0, %v531
        %v533 = vrot.slane %v528, %v532
        %v535 = vadd.f32 %v506, %v533
        %v536 = vadd.f32 %v513, %v533
        %v537 = vadd.f32 %v520, %v533
        %v538 = vadd.f32 %v527, %v533
        %v539 = vmax.f32 %v535, 0.0
        %v540 = vmax.f32 %v536, 0.0
        %v541 = vmax.f32 %v537, 0.0
        %v542 = vmax.f32 %v538, 0.0
        %v547 = vrot.slane %v540, 7
        %vm548 = vcmask 1041409
        %v549 = vsel %vm548, %v547, %v539
        %v550 = vrot.slane %v541, 6
        %vm551 = vcmask 1042434
        %v552 = vsel %vm551, %v550, %v549
        %v553 = vrot.slane %v542, 5
        %vm554 = vcmask 1043459
        %v555 = vsel %vm554, %v553, %v552
        %557 = vst [vmem:[%s204] sm:$0xf] %v555
        %s558 = sand.u32 %s97, 1
        %s559 = scalar_lea.sflag [#allocation4], %s558
        %s560 = sand.u32 %s97, 1
        %s561 = smul.addr %s560, 4
        %s562 = scalar_lea.vmem [#allocation7], %s561
        // Predicated region
        $region41: #{tpu_custom_call.1} parent=31 // pred_check
          %p563 = pneg %p107
        $region42: #{tpu_custom_call.1} parent=31 // pred_check_branch
          %565 = sbr.rel (%p563) target = $region44
        $region43: #{tpu_custom_call.1} parent=31 // pred_region
          %s567 = ssub.s32 64, 64
          %568 = vsyncadd %s559, %s567
          %s569 = smul.addr %s21, 64
          %s570 = scalar_lea.hbm %s3, %s569
          %s572 = sshll.u32 %s562, 4
          %s573 = int_to_ptr.vmem [resolvable:$true] %s572
          %575 = dma.vmem_to_hbm [thread:$0]  %s573, 64, %s570, %s559
        $region44: #{tpu_custom_call.1} parent=31 // pred_fallthru
          _
      $region32: #{tpu_custom_call.1} parent=5 // pred_fallthru
        _
      %p576 = scmp.le.s32.totalorder 2, %s16
      // Predicated region
      $region45: #{tpu_custom_call.1} parent=5 // pred_check
        %p577 = pneg %p576
      $region46: #{tpu_custom_call.1} parent=5 // pred_check_branch
        %579 = sbr.rel (%p577) target = $region48
      $region47: #{tpu_custom_call.1} parent=5 // pred_region
        %s580 = ssub.s32 %s16, 2
        // Predicated region
        $region49: #{tpu_custom_call.1} parent=47 // pred_check
          %p581 = pneg %p113
        $region50: #{tpu_custom_call.1} parent=47 // pred_check_branch
          %583 = sbr.rel (%p581) target = $region52
        $region51: #{tpu_custom_call.1} parent=47 // pred_region
          %s584 = sand.u32 %s98, 1
          %s585 = scalar_lea.sflag [#allocation4], %s584
          %s586 = sand.u32 %s98, 1
          %s587 = smul.addr %s586, 4
          %s588 = scalar_lea.vmem [#allocation7], %s587
          %589 = dma.done %s585, 64
        $region52: #{tpu_custom_call.1} parent=47 // pred_fallthru
          _
      $region48: #{tpu_custom_call.1} parent=5 // pred_fallthru
        _
    $region6: #{tpu_custom_call.1} parent=1 // loop_footer
      %s20 = sadd.s32 1, %s16
    $region7: #{tpu_custom_call.1} parent=1 // loop_footer_branch
      %15 = sbr.rel target = $region3
    $region8: #{tpu_custom_call.1} parent=1 // loop_exit
      _
    %590 = vsyncpa [#allocation3], 1
    %s591 = scalar_lea.sflag [#allocation3], 1
    %592 = vsyncpa %s591, 1
    %593 = vsyncpa [#allocation6], 1
    %594 = vsyncpa [#allocation4], 1
    %s595 = scalar_lea.sflag [#allocation4], 1
    %596 = vsyncpa %s595, 1

</llo_original>
